<compile_context>
chip_gen: v7x
topology: tpu7x:2x2x1
jax: 0.10.0
libtpu: 0.0.40
codegen_flags: <defaults>
</compile_context>

<pallas_src>
import jax
import jax.numpy as jnp
from jax.experimental import pallas as pl
from jax.experimental.pallas import tpu as pltpu

_MIB = 1024 * 1024


def _vmem_capacity_bytes():
    """Physical VMEM per core; conservative 64 MiB fallback if the query fails."""
    try:
        cap = getattr(pltpu.get_tpu_info(), "vmem_capacity_bytes", None)
        if cap:
            return int(cap)
    except Exception:
        pass
    return 64 * _MIB


# ---------------------------------------------------------------------------
# Fast path: whole (C, HW) slab resident per batch element -> single kernel.
# ---------------------------------------------------------------------------
def _make_fused_kernel(hw):
    inv_hw = 1.0 / hw

    def kernel(x_ref, wsq_ref, wex_ref, wsse_ref, out_ref):
        x = x_ref[0]                                                        # (C, HW)
        # cSE: spatial sum on the MXU (f32 accumulate, no full-tile upcast).
        ones = jnp.ones((x.shape[1], 1), dtype=x.dtype)
        z = jnp.dot(x, ones, preferred_element_type=jnp.float32) * inv_hw   # (C, 1)
        s = jnp.dot(wsq_ref[...], z, preferred_element_type=jnp.float32)    # (C//2, 1)
        e = jnp.dot(wex_ref[...], s, preferred_element_type=jnp.float32)    # (C, 1)
        gate_c = jax.nn.sigmoid(e).astype(x.dtype)                          # (C, 1)
        # sSE: channel reduce as a (1, C) @ (C, HW) MXU matmul.
        q = jnp.dot(wsse_ref[...], x, preferred_element_type=jnp.float32)   # (1, HW)
        gate_s = jax.nn.sigmoid(q).astype(x.dtype)                          # (1, HW)
        # Fused apply: one multiply per element, gate math in x.dtype.
        out_ref[0] = x * (gate_c + gate_s)

    return kernel


# ---------------------------------------------------------------------------
# Two-phase fallback, phase 1: spatial-sum accumulator -> cSE gate.
# ---------------------------------------------------------------------------
def _make_reduce_kernel(hw, thw, masked):
    inv_hw = 1.0 / hw

    def kernel(x_ref, wsq_ref, wex_ref, gc_ref, acc_ref):
        t = pl.program_id(1)

        @pl.when(t == 0)
        def _():
            acc_ref[...] = jnp.zeros_like(acc_ref)

        x = x_ref[0]                                                        # (C, thw)
        if masked:  # ragged last tile: zero lanes past HW before reducing
            col = jax.lax.broadcasted_iota(jnp.int32, x.shape, 1) + t * thw
            x = jnp.where(col < hw, x, jnp.zeros_like(x))
        ones = jnp.ones((x.shape[1], 1), dtype=x.dtype)
        acc_ref[...] += jnp.dot(x, ones, preferred_element_type=jnp.float32)  # (C, 1)

        @pl.when(t == pl.num_programs(1) - 1)
        def _():
            z = acc_ref[...] * inv_hw
            s = jnp.dot(wsq_ref[...], z, preferred_element_type=jnp.float32)  # (C//2, 1)
            e = jnp.dot(wex_ref[...], s, preferred_element_type=jnp.float32)  # (C, 1)
            gc_ref[0] = jax.nn.sigmoid(e)

    return kernel


# ---------------------------------------------------------------------------
# Two-phase fallback, phase 2: fused sSE gate + apply, tiled over HW.
# ---------------------------------------------------------------------------
def _apply_kernel(x_ref, gc_ref, wsse_ref, out_ref):
    x = x_ref[0]                                                            # (C, thw)
    # sSE channel reduce on the MXU (VPU stays free; HBM remains the binding unit).
    q = jnp.dot(wsse_ref[...], x, preferred_element_type=jnp.float32)       # (1, thw)
    gate_c = gc_ref[0].astype(x.dtype)                                      # (C, 1)
    gate_s = jax.nn.sigmoid(q).astype(x.dtype)                              # (1, thw)
    out_ref[0] = x * (gate_c + gate_s)


def _pick_hw_tile(hw, c, itemsize, budget_bytes):
    """Lane-dense HW tile: multiple of 128, >= 512 lanes, (C, thw) ~<= budget."""
    t = (budget_bytes // max(1, c * itemsize)) // 128 * 128
    t = max(512, t)
    if t >= hw:
        return hw  # single full-extent tile is always legal
    return t


def scse_forward(u_nchw, w_sq, w_ex, w_sse, *, force_two_phase=False, hw_tile=None):
    """scSE forward on NCHW input.

    Weights are the PyTorch 1x1-conv kernels squeezed to 2-D:
      w_sq:  (C//2, C)   Conv_Squeeze
      w_ex:  (C, C//2)   Conv_Excitation
      w_sse: (C, 1)      sSE Conv1x1 (out-channel dim squeezed)
    """
    B, C, H, W = u_nchw.shape
    HW = H * W
    x = u_nchw.reshape(B, C, HW)                 # NCHW -> (B, C, HW): free, no transpose
    itemsize = x.dtype.itemsize
    w_sse_row = w_sse.reshape(1, C).astype(x.dtype)   # (C,1) -> (1,C) row for MXU reduce

    vmem_cap = _vmem_capacity_bytes()
    vmem_budget = (vmem_cap * 3) // 4            # headroom vs physical VMEM (48/96 MiB)

    slab = C * HW * itemsize                     # one (C, HW) batch slab
    weights_bytes = (w_sq.size * w_sq.dtype.itemsize
                     + w_ex.size * w_ex.dtype.itemsize
                     + w_sse_row.size * w_sse_row.dtype.itemsize)

    # ------------------- fast path: single pass over x -------------------
    if (not force_two_phase) and (4 * slab + weights_bytes + 2 * _MIB <= vmem_budget):
        out = pl.pallas_call(
            _make_fused_kernel(HW),
            out_shape=jax.ShapeDtypeStruct((B, C, HW), x.dtype),
            grid=(B,),
            in_specs=[
                pl.BlockSpec((1, C, HW), lambda b: (b, 0, 0)),
                pl.BlockSpec((C // 2, C), lambda b: (0, 0)),
                pl.BlockSpec((C, C // 2), lambda b: (0, 0)),
                pl.BlockSpec((1, C), lambda b: (0, 0)),
            ],
            out_specs=pl.BlockSpec((1, C, HW), lambda b: (b, 0, 0)),
            compiler_params=pltpu.CompilerParams(
                dimension_semantics=("parallel",),
                vmem_limit_bytes=vmem_budget,
            ),
            cost_estimate=pl.CostEstimate(
                flops=6 * B * C * HW,
                transcendentals=B * (HW + C),
                bytes_accessed=2 * B * C * HW * itemsize,
            ),
        )(x, w_sq, w_ex, w_sse_row)
        return out.reshape(B, C, H, W)

    # ------------------- two-phase fallback: tiled over HW -------------------
    per_buffer = 8 * _MIB if vmem_cap >= 96 * _MIB else 5 * _MIB   # v5e/v6e vs v7x
    thw = hw_tile if hw_tile is not None else _pick_hw_tile(HW, C, itemsize, per_buffer)
    nt = pl.cdiv(HW, thw)
    masked = (HW % thw) != 0
    vmem_limit = min(vmem_budget, max(32 * _MIB, 4 * C * thw * itemsize + 8 * _MIB))

    # phase 1: gate_c = sigmoid(W_ex @ (W_sq @ mean_hw(x))) -> (B, C, 1) f32
    gate_c = pl.pallas_call(
        _make_reduce_kernel(HW, thw, masked),
        out_shape=jax.ShapeDtypeStruct((B, C, 1), jnp.float32),
        grid_spec=pltpu.PrefetchScalarGridSpec(
            num_scalar_prefetch=0,
            grid=(B, nt),
            in_specs=[
                pl.BlockSpec((1, C, thw), lambda b, t: (b, 0, t)),
                pl.BlockSpec((C // 2, C), lambda b, t: (0, 0)),
                pl.BlockSpec((C, C // 2), lambda b, t: (0, 0)),
            ],
            out_specs=pl.BlockSpec((1, C, 1), lambda b, t: (b, 0, 0)),
            scratch_shapes=[pltpu.VMEM((C, 1), jnp.float32)],
        ),
        compiler_params=pltpu.CompilerParams(
            dimension_semantics=("parallel", "arbitrary"),
            vmem_limit_bytes=vmem_limit,
        ),
        cost_estimate=pl.CostEstimate(
            flops=2 * B * C * HW,
            transcendentals=B * C,
            bytes_accessed=B * C * HW * itemsize,
        ),
    )(x, w_sq, w_ex)

    # phase 2: out = x * (gate_c + sigmoid(w_sse . x_channels)), tiled over HW
    out = pl.pallas_call(
        _apply_kernel,
        out_shape=jax.ShapeDtypeStruct((B, C, HW), x.dtype),
        grid_spec=pltpu.PrefetchScalarGridSpec(
            num_scalar_prefetch=0,
            grid=(B, nt),
            in_specs=[
                pl.BlockSpec((1, C, thw), lambda b, t: (b, 0, t)),
                pl.BlockSpec((1, C, 1), lambda b, t: (b, 0, 0)),
                pl.BlockSpec((1, C), lambda b, t: (0, 0)),
            ],
            out_specs=pl.BlockSpec((1, C, thw), lambda b, t: (b, 0, t)),
        ),
        compiler_params=pltpu.CompilerParams(
            dimension_semantics=("parallel", "parallel"),
            vmem_limit_bytes=vmem_limit,
        ),
        cost_estimate=pl.CostEstimate(
            flops=5 * B * C * HW,
            transcendentals=B * HW,
            bytes_accessed=2 * B * C * HW * itemsize,
        ),
    )(x, gate_c, w_sse_row)

    return out.reshape(B, C, H, W)


def scse_reference(u, w_sq, w_ex, w_sse):
    """Pure-JAX reference mirroring the PyTorch forward (NCHW)."""
    z = jnp.mean(u, axis=(2, 3))                         # (B, C)
    s = z @ w_sq.T                                       # (B, C//2)
    e = s @ w_ex.T                                       # (B, C)
    gate_c = jax.nn.sigmoid(e)[:, :, None, None]         # (B, C, 1, 1)
    q = jnp.einsum('bchw,c->bhw', u, w_sse[:, 0])        # (B, H, W)
    gate_s = jax.nn.sigmoid(q)[:, None, :, :]            # (B, 1, H, W)
    return u * gate_c + u * gate_s


if __name__ == "__main__":
    B, C, H, W = 2, 4, 16, 16

    key = jax.random.PRNGKey(0)
    k_u, k_sq, k_ex, k_sse, k_u2 = jax.random.split(key, 5)

    # Input (NCHW, like PyTorch).
    u = jax.random.normal(k_u, (B, C, H, W), dtype=jnp.float32)

    # 1x1-conv weights (PyTorch shape (out, in, 1, 1) squeezed to 2-D).
    w_sq = jax.random.normal(k_sq, (C // 2, C), dtype=jnp.float32) * 0.5   # Conv_Squeeze
    w_ex = jax.random.normal(k_ex, (C, C // 2), dtype=jnp.float32) * 0.5   # Conv_Excitation
    w_sse = jax.random.normal(k_sse, (C, 1), dtype=jnp.float32) * 0.5      # sSE Conv1x1

    # 1) Fast (single-pass, VMEM-resident) path.
    out_fast = jax.block_until_ready(scse_forward(u, w_sq, w_ex, w_sse))
    ref = scse_reference(u, w_sq, w_ex, w_sse)
    assert out_fast.shape == (B, C, H, W)
    assert jnp.allclose(out_fast, ref, atol=1e-5, rtol=1e-5), "fast path mismatch"

    # 2) Forced two-phase path with 2 HW tiles (exercises the accumulator path).
    out_tiled = jax.block_until_ready(
        scse_forward(u, w_sq, w_ex, w_sse, force_two_phase=True, hw_tile=128))
    assert jnp.allclose(out_tiled, ref, atol=1e-5, rtol=1e-5), "tiled path mismatch"

    # 3) Ragged spatial extent (HW=225 not a multiple of 128): masked last tile.
    u2 = jax.random.normal(k_u2, (B, C, 15, 15), dtype=jnp.float32)
    ref2 = scse_reference(u2, w_sq, w_ex, w_sse)
    out2_fast = jax.block_until_ready(scse_forward(u2, w_sq, w_ex, w_sse))
    assert jnp.allclose(out2_fast, ref2, atol=1e-5, rtol=1e-5), "ragged fast mismatch"
    out2_tiled = jax.block_until_ready(
        scse_forward(u2, w_sq, w_ex, w_sse, force_two_phase=True, hw_tile=128))
    assert jnp.allclose(out2_tiled, ref2, atol=1e-5, rtol=1e-5), "ragged tiled mismatch"

    print("KERNEL_OK")
</pallas_src>

<mosaic_0001>
module attributes {stable_mosaic.version = 11 : i64} {
  func.func @kernel(%arg0: i32, %arg1: memref<1x4x256xf32, #tpu.memory_space<vmem>>, %arg2: memref<2x4xf32, #tpu.memory_space<vmem>>, %arg3: memref<4x2xf32, #tpu.memory_space<vmem>>, %arg4: memref<1x4xf32, #tpu.memory_space<vmem>>, %arg5: memref<1x4x256xf32, #tpu.memory_space<vmem>>) attributes {dimension_semantics = [#tpu.dimension_semantics<parallel>], iteration_bounds = array<i64: 2>, scalar_prefetch = 0 : i64, scratch_operands = 0 : i64, tpu.core_type = #tpu.core_type<tc>, window_params = [{transform_indices = @transform_0, window_bounds = array<i64: 1, 4, 256>}, {pipeline_mode = #tpu.pipeline_mode<synchronous>, transform_indices = @transform_1, window_bounds = array<i64: 2, 4>}, {pipeline_mode = #tpu.pipeline_mode<synchronous>, transform_indices = @transform_2, window_bounds = array<i64: 4, 2>}, {pipeline_mode = #tpu.pipeline_mode<synchronous>, transform_indices = @transform_3, window_bounds = array<i64: 1, 4>}, {transform_indices = @transform_4, window_bounds = array<i64: 1, 4, 256>}]} {
    %c0 = arith.constant 0 : index
    %c0_0 = arith.constant 0 : index
    %c0_1 = arith.constant 0 : index
    %0 = vector.load %arg1[%c0, %c0_0, %c0_1] : memref<1x4x256xf32, #tpu.memory_space<vmem>>, vector<1x4x256xf32>
    %1 = vector.shape_cast %0 : vector<1x4x256xf32> to vector<4x256xf32>
    %cst = arith.constant 1.000000e+00 : f32
    %2 = vector.broadcast %cst : f32 to vector<256x1xf32>
    %cst_2 = arith.constant dense<0.000000e+00> : vector<4x1xf32>
    %3 = tpu.matmul %1, %2, %cst_2 {dimension_numbers = #tpu.dot_dimension_numbers<[1], [0], [0], [1], [0, 0, 1, 1], [], []>} : vector<4x256xf32>, vector<256x1xf32>, vector<4x1xf32> -> vector<4x1xf32>
    %cst_3 = arith.constant 3.906250e-03 : f32
    %4 = vector.broadcast %cst_3 : f32 to vector<4x1xf32>
    %5 = arith.mulf %3, %4 : vector<4x1xf32>
    %c0_4 = arith.constant 0 : index
    %c0_5 = arith.constant 0 : index
    %6 = vector.load %arg2[%c0_4, %c0_5] : memref<2x4xf32, #tpu.memory_space<vmem>>, vector<2x4xf32>
    %cst_6 = arith.constant dense<0.000000e+00> : vector<2x1xf32>
    %7 = tpu.matmul %6, %5, %cst_6 {dimension_numbers = #tpu.dot_dimension_numbers<[1], [0], [0], [1], [0, 0, 1, 1], [], []>} : vector<2x4xf32>, vector<4x1xf32>, vector<2x1xf32> -> vector<2x1xf32>
    %c0_7 = arith.constant 0 : index
    %c0_8 = arith.constant 0 : index
    %8 = vector.load %arg3[%c0_7, %c0_8] : memref<4x2xf32, #tpu.memory_space<vmem>>, vector<4x2xf32>
    %cst_9 = arith.constant dense<0.000000e+00> : vector<4x1xf32>
    %9 = tpu.matmul %8, %7, %cst_9 {dimension_numbers = #tpu.dot_dimension_numbers<[1], [0], [0], [1], [0, 0, 1, 1], [], []>} : vector<4x2xf32>, vector<2x1xf32>, vector<4x1xf32> -> vector<4x1xf32>
    %10 = arith.negf %9 : vector<4x1xf32>
    %11 = math.exp %10 : vector<4x1xf32>
    %cst_10 = arith.constant 1.000000e+00 : f32
    %12 = vector.broadcast %cst_10 : f32 to vector<4x1xf32>
    %13 = arith.addf %12, %11 : vector<4x1xf32>
    %14 = arith.divf %12, %13 : vector<4x1xf32>
    %c0_11 = arith.constant 0 : index
    %c0_12 = arith.constant 0 : index
    %15 = vector.load %arg4[%c0_11, %c0_12] : memref<1x4xf32, #tpu.memory_space<vmem>>, vector<1x4xf32>
    %cst_13 = arith.constant dense<0.000000e+00> : vector<1x256xf32>
    %16 = tpu.matmul %15, %1, %cst_13 {dimension_numbers = #tpu.dot_dimension_numbers<[1], [0], [0], [1], [0, 0, 1, 1], [], []>} : vector<1x4xf32>, vector<4x256xf32>, vector<1x256xf32> -> vector<1x256xf32>
    %17 = arith.negf %16 : vector<1x256xf32>
    %18 = math.exp %17 : vector<1x256xf32>
    %cst_14 = arith.constant 1.000000e+00 : f32
    %19 = vector.broadcast %cst_14 : f32 to vector<1x256xf32>
    %20 = arith.addf %19, %18 : vector<1x256xf32>
    %21 = arith.divf %19, %20 : vector<1x256xf32>
    %22 = vector.broadcast %14 : vector<4x1xf32> to vector<4x256xf32>
    %23 = vector.broadcast %21 : vector<1x256xf32> to vector<4x256xf32>
    %24 = arith.addf %22, %23 : vector<4x256xf32>
    %25 = arith.mulf %1, %24 : vector<4x256xf32>
    %c0_15 = arith.constant 0 : index
    %c0_16 = arith.constant 0 : index
    %c0_17 = arith.constant 0 : index
    %26 = vector.load %arg5[%c0_15, %c0_16, %c0_17] : memref<1x4x256xf32, #tpu.memory_space<vmem>>, vector<1x4x256xf32>
    %27 = vector.shape_cast %26 : vector<1x4x256xf32> to vector<4x256xf32>
    %28 = vector.shape_cast %25 : vector<4x256xf32> to vector<1x4x256xf32>
    tpu.vector_store %arg5[%c0_15, %c0_16, %c0_17], %28 {strides = array<i32>} : memref<1x4x256xf32, #tpu.memory_space<vmem>>, vector<1x4x256xf32>,
    return
  }
  func.func @transform_0(%arg0: i32) -> (i32, i32, i32) {
    %c0_i32 = arith.constant 0 : i32
    %c0_i32_0 = arith.constant 0 : i32
    %c0_i32_1 = arith.constant 0 : i32
    return %arg0, %c0_i32, %c0_i32_0 : i32, i32, i32
  }
  func.func @transform_1(%arg0: i32) -> (i32, i32) {
    %c0_i32 = arith.constant 0 : i32
    %c0_i32_0 = arith.constant 0 : i32
    %c0_i32_1 = arith.constant 0 : i32
    return %c0_i32, %c0_i32_0 : i32, i32
  }
  func.func @transform_2(%arg0: i32) -> (i32, i32) {
    %c0_i32 = arith.constant 0 : i32
    %c0_i32_0 = arith.constant 0 : i32
    %c0_i32_1 = arith.constant 0 : i32
    return %c0_i32, %c0_i32_0 : i32, i32
  }
  func.func @transform_3(%arg0: i32) -> (i32, i32) {
    %c0_i32 = arith.constant 0 : i32
    %c0_i32_0 = arith.constant 0 : i32
    %c0_i32_1 = arith.constant 0 : i32
    return %c0_i32, %c0_i32_0 : i32, i32
  }
  func.func @transform_4(%arg0: i32) -> (i32, i32, i32) {
    %c0_i32 = arith.constant 0 : i32
    %c0_i32_0 = arith.constant 0 : i32
    %c0_i32_1 = arith.constant 0 : i32
    return %arg0, %c0_i32, %c0_i32_0 : i32, i32, i32
  }
}

</mosaic_0001>

<llo_original>
// kernel: tpu_custom_call.1
$region0: #{tpu_custom_call.1}
  #allocation0 [shape = 'u32[]', space=smem, size = 0x4, offset = 0x4, fixed_abs, tag = 'smem constant byte address 0x4 - core index']
  #allocation1 [shape = 'u32[144,128]{1,0:T(1,128)}', space=vmem, size = 0x12000, scoped, tag = 'internal scratch']
  %s0 = inlined_call_operand.hbm [shape: f32[2,4,256], index: 0, kind: input, shape index: {}]
  %s1 = inlined_call_operand.vmem [shape: f32[2,4], index: 1, kind: input, shape index: {}]
  %s2 = inlined_call_operand.vmem [shape: f32[4,2], index: 2, kind: input, shape index: {}]
  %s3 = inlined_call_operand.vmem [shape: f32[1,4], index: 3, kind: input, shape index: {}]
  %s4 = inlined_call_operand.hbm [shape: f32[2,4,256], index: 4, kind: output, shape index: {}]
  %s5 = sld [smem:[#allocation0]]
  $region53: #{tpu_custom_call.1} parent=0
    _
  %s7 = ssub.s32 1, %s5
  %s8 = scalar_select 0, %s7, %s5
  $region1: #{tpu_custom_call.1} parent=0
    #allocation2 [shape = 'u8[8192]{0}', space=vmem, size = 0x2000, scoped, tag = 'input window, operand 0']
    #allocation3 [shape = 's32[2]{0}', space=sflag, size = 0x8, scoped, tag = 'scoped memory for tpu_custom_call.1']
    #allocation4 [shape = 's32[2]{0}', space=sflag, size = 0x8, scoped, tag = 'scoped memory for tpu_custom_call.1']
    #allocation5 [shape = 'u8[8192]{0}', space=vmem, size = 0x2000, scoped, tag = 'output window, operand 0']
    %9 = vsyncpa [#allocation3], 0
    %s10 = scalar_lea.sflag [#allocation3], 1
    %11 = vsyncpa %s10, 0
    %12 = vsyncpa [#allocation4], 0
    %s13 = scalar_lea.sflag [#allocation4], 1
    %14 = vsyncpa %s13, 0
    loop: start=0, step=1, limit=4
    $region2: #{tpu_custom_call.1} parent=1 // loop_pre_header
      _
    $region3: #{tpu_custom_call.1} parent=1 // loop_header
      %s16 = sphi 0, %s20
      %p17 = scmp.ge.s32.totalorder %s16, 4
      %s26 = sphi 0, %s28
      %s29 = sphi 0, %s26
      %s30 = sphi 0, %s29
      %s46 = sphi 0, %s30
      %s50 = sphi 0, %s50
      %s52 = sphi 0, %s50
      %s53 = sphi 0, %s52
      %s67 = sphi 0, %s53
      %s71 = sphi 0, %s71
      %s73 = sphi 0, %s71
      %s74 = sphi 0, %s73
      %s88 = sphi 0, %s74
      %s92 = sphi 0, %s92
      %s94 = sphi 0, %s92
      %s95 = sphi 0, %s94
      %s109 = sphi 0, %s95
      %s115 = sphi 0, %s117
      %s118 = sphi 0, %s115
      %s119 = sphi 0, %s118
      %s135 = sphi 0, %s119
    $region4: #{tpu_custom_call.1} parent=1 // loop_header_branch
      %19 = sbr.rel (%p17) target = $region8
    $region5: #{tpu_custom_call.1} parent=1 // loop_body
      %s21 = ssub.s32 %s16, 1
      %s22 = ssub.s32 %s16, 2
      %s23 = sadd.s32 %s16, 1
      %s24 = ssub.s32 %s16, %s23
      %p25 = scmp.eq.s32.totalorder %s24, 0
      %s27 = sadd.s32 %s26, 1
      %s28 = scalar_select %p25, %s26, %s27
      %p31 = pneg %p25
      %p32 = scmp.eq.s32.totalorder %s16, 1
      %p33 = por %p31, %p32
      %p34 = scmp.ne.s32.totalorder %s26, %s29
      %p35 = scmp.eq.s32.totalorder %s16, 0
      %p36 = por %p34, %p35
      %p37 = scmp.ne.s32.totalorder %s26, %s29
      %p38 = scmp.eq.s32.totalorder %s21, 1
      %p39 = por %p37, %p38
      %p40 = scmp.ne.s32.totalorder %s29, %s30
      %p41 = scmp.eq.s32.totalorder %s21, 0
      %p42 = por %p40, %p41
      %p43 = scmp.ne.s32.totalorder %s29, %s30
      %p44 = scmp.eq.s32.totalorder %s22, 1
      %p45 = por %p43, %p44
      %p47 = scmp.ne.s32.totalorder %s30, %s46
      %p48 = scmp.eq.s32.totalorder %s22, 0
      %p49 = por %p47, %p48
      %s51 = sadd.s32 %s50, 1
      %p54 = scmp.eq.s32.totalorder %s16, 1
      %p55 = scmp.ne.s32.totalorder %s50, %s52
      %p56 = scmp.eq.s32.totalorder %s16, 0
      %p57 = por %p55, %p56
      %p58 = scmp.ne.s32.totalorder %s50, %s52
      %p59 = scmp.eq.s32.totalorder %s21, 1
      %p60 = por %p58, %p59
      %p61 = scmp.ne.s32.totalorder %s52, %s53
      %p62 = scmp.eq.s32.totalorder %s21, 0
      %p63 = por %p61, %p62
      %p64 = scmp.ne.s32.totalorder %s52, %s53
      %p65 = scmp.eq.s32.totalorder %s22, 1
      %p66 = por %p64, %p65
      %p68 = scmp.ne.s32.totalorder %s53, %s67
      %p69 = scmp.eq.s32.totalorder %s22, 0
      %p70 = por %p68, %p69
      %s72 = sadd.s32 %s71, 1
      %p75 = scmp.eq.s32.totalorder %s16, 1
      %p76 = scmp.ne.s32.totalorder %s71, %s73
      %p77 = scmp.eq.s32.totalorder %s16, 0
      %p78 = por %p76, %p77
      %p79 = scmp.ne.s32.totalorder %s71, %s73
      %p80 = scmp.eq.s32.totalorder %s21, 1
      %p81 = por %p79, %p80
      %p82 = scmp.ne.s32.totalorder %s73, %s74
      %p83 = scmp.eq.s32.totalorder %s21, 0
      %p84 = por %p82, %p83
      %p85 = scmp.ne.s32.totalorder %s73, %s74
      %p86 = scmp.eq.s32.totalorder %s22, 1
      %p87 = por %p85, %p86
      %p89 = scmp.ne.s32.totalorder %s74, %s88
      %p90 = scmp.eq.s32.totalorder %s22, 0
      %p91 = por %p89, %p90
      %s93 = sadd.s32 %s92, 1
      %p96 = scmp.eq.s32.totalorder %s16, 1
      %p97 = scmp.ne.s32.totalorder %s92, %s94
      %p98 = scmp.eq.s32.totalorder %s16, 0
      %p99 = por %p97, %p98
      %p100 = scmp.ne.s32.totalorder %s92, %s94
      %p101 = scmp.eq.s32.totalorder %s21, 1
      %p102 = por %p100, %p101
      %p103 = scmp.ne.s32.totalorder %s94, %s95
      %p104 = scmp.eq.s32.totalorder %s21, 0
      %p105 = por %p103, %p104
      %p106 = scmp.ne.s32.totalorder %s94, %s95
      %p107 = scmp.eq.s32.totalorder %s22, 1
      %p108 = por %p106, %p107
      %p110 = scmp.ne.s32.totalorder %s95, %s109
      %p111 = scmp.eq.s32.totalorder %s22, 0
      %p112 = por %p110, %p111
      %s113 = ssub.s32 %s16, %s23
      %p114 = scmp.eq.s32.totalorder %s113, 0
      %s116 = sadd.s32 %s115, 1
      %s117 = scalar_select %p114, %s115, %s116
      %p120 = pneg %p114
      %p121 = scmp.eq.s32.totalorder %s16, 1
      %p122 = por %p120, %p121
      %p123 = scmp.ne.s32.totalorder %s115, %s118
      %p124 = scmp.eq.s32.totalorder %s16, 0
      %p125 = por %p123, %p124
      %p126 = scmp.ne.s32.totalorder %s115, %s118
      %p127 = scmp.eq.s32.totalorder %s21, 1
      %p128 = por %p126, %p127
      %p129 = scmp.ne.s32.totalorder %s118, %s119
      %p130 = scmp.eq.s32.totalorder %s21, 0
      %p131 = por %p129, %p130
      %p132 = scmp.ne.s32.totalorder %s118, %s119
      %p133 = scmp.eq.s32.totalorder %s22, 1
      %p134 = por %p132, %p133
      %p136 = scmp.ne.s32.totalorder %s119, %s135
      %p137 = scmp.eq.s32.totalorder %s22, 0
      %p138 = por %p136, %p137
      %p139 = scmp.le.s32.totalorder 1, %s16
      %p140 = scmp.lt.s32.totalorder %s16, 3
      %p141 = pnand %p139, %p140
      %p142 = pneg %p141
      // Predicated region
      $region9: #{tpu_custom_call.1} parent=5 // pred_check
        _
      $region10: #{tpu_custom_call.1} parent=5 // pred_check_branch
        %144 = sbr.rel (%p141) target = $region12
      $region11: #{tpu_custom_call.1} parent=5 // pred_region
        %s145 = ssub.s32 %s16, 1
        // Predicated region
        $region13: #{tpu_custom_call.1} parent=11 // pred_check
          %p146 = pneg %p63
        $region14: #{tpu_custom_call.1} parent=11 // pred_check_branch
          %148 = sbr.rel (%p146) target = $region16
        $region15: #{tpu_custom_call.1} parent=11 // pred_region
          _
        $region16: #{tpu_custom_call.1} parent=11 // pred_fallthru
          _
        // Predicated region
        $region17: #{tpu_custom_call.1} parent=11 // pred_check
          %p149 = pneg %p84
        $region18: #{tpu_custom_call.1} parent=11 // pred_check_branch
          %151 = sbr.rel (%p149) target = $region20
        $region19: #{tpu_custom_call.1} parent=11 // pred_region
          _
        $region20: #{tpu_custom_call.1} parent=11 // pred_fallthru
          _
        // Predicated region
        $region21: #{tpu_custom_call.1} parent=11 // pred_check
          %p152 = pneg %p105
        $region22: #{tpu_custom_call.1} parent=11 // pred_check_branch
          %154 = sbr.rel (%p152) target = $region24
        $region23: #{tpu_custom_call.1} parent=11 // pred_region
          _
        $region24: #{tpu_custom_call.1} parent=11 // pred_fallthru
          _
      $region12: #{tpu_custom_call.1} parent=5 // pred_fallthru
        _
      %p155 = scmp.lt.s32.totalorder %s16, 2
      // Predicated region
      $region25: #{tpu_custom_call.1} parent=5 // pred_check
        %p156 = pneg %p155
      $region26: #{tpu_custom_call.1} parent=5 // pred_check_branch
        %158 = sbr.rel (%p156) target = $region28
      $region27: #{tpu_custom_call.1} parent=5 // pred_region
        // Predicated region
        $region29: #{tpu_custom_call.1} parent=27 // pred_check
          %p159 = pneg %p36
        $region30: #{tpu_custom_call.1} parent=27 // pred_check_branch
          %161 = sbr.rel (%p159) target = $region32
        $region31: #{tpu_custom_call.1} parent=27 // pred_region
          %s162 = sand.u32 %s26, 1
          %s163 = scalar_lea.sflag [#allocation3], %s162
          %s164 = sand.u32 %s26, 1
          %s165 = smul.addr %s164, 8
          %s166 = scalar_lea.vmem [#allocation2], %s165
          %s168 = ssub.s32 128, 128
          %169 = vsyncadd %s163, %s168
          %s170 = smul.addr %s16, 2
          %s171 = smul.addr %s170, 64
          %s172 = scalar_lea.hbm %s0, %s171
          %s174 = sshll.u32 %s166, 4
          %s175 = int_to_ptr.vmem [resolvable:$true] %s174
          %177 = dma.hbm_to_vmem [thread:$0]  %s172, 128, %s175, %s163
        $region32: #{tpu_custom_call.1} parent=27 // pred_fallthru
          _
      $region28: #{tpu_custom_call.1} parent=5 // pred_fallthru
        _
      %p178 = scmp.le.s32.totalorder 1, %s16
      %p179 = scmp.lt.s32.totalorder %s16, 3
      %p180 = pnand %p178, %p179
      %p181 = pneg %p180
      // Predicated region
      $region33: #{tpu_custom_call.1} parent=5 // pred_check
        _
      $region34: #{tpu_custom_call.1} parent=5 // pred_check_branch
        %183 = sbr.rel (%p180) target = $region36
      $region35: #{tpu_custom_call.1} parent=5 // pred_region
        %s184 = ssub.s32 %s16, 1
        %s185 = sand.u32 %s29, 1
        %s186 = scalar_lea.sflag [#allocation3], %s185
        %s187 = sand.u32 %s29, 1
        %s188 = smul.addr %s187, 8
        %s189 = scalar_lea.vmem [#allocation2], %s188
        // Predicated region
        $region37: #{tpu_custom_call.1} parent=35 // pred_check
          %p190 = pneg %p42
        $region38: #{tpu_custom_call.1} parent=35 // pred_check_branch
          %192 = sbr.rel (%p190) target = $region40
        $region39: #{tpu_custom_call.1} parent=35 // pred_region
          %193 = dma.done %s186, 128
        $region40: #{tpu_custom_call.1} parent=35 // pred_fallthru
          _
        %s194 = sand.u32 %s29, 1
        %s195 = scalar_lea.sflag [#allocation3], %s194
        %s196 = sand.u32 %s29, 1
        %s197 = smul.addr %s196, 8
        %s198 = scalar_lea.vmem [#allocation2], %s197
        %p199 = pneg %p42
        %p200 = pneg %p39
        %p201 = pneg %p63
        %p202 = pneg %p60
        %p203 = pneg %p84
        %p204 = pneg %p81
        %p205 = pneg %p105
        %p206 = pneg %p102
        %p207 = pneg %p131
        %p208 = pneg %p128
        %s209 = sand.u32 %s118, 1
        %s210 = scalar_lea.sflag [#allocation4], %s209
        %s211 = sand.u32 %s118, 1
        %s212 = smul.addr %s211, 8
        %s213 = scalar_lea.vmem [#allocation5], %s212
        %v214 = vld [vmem:[%s189] sm:$0xff]
        %v216 = vcombine.high %v214, %v214
        %218 = vmatprep.subr.mxu0 0.0
        %219 = vmatpush1.msra.mxu0 1.0
        %220 = vmatprep.subr.mxu0 0.0
        %221 = vmatpush1.msra.mxu0 1.0
        %222 = vmatprep.subr.mxu0 0.0
        %223 = vmatpush1.msra.mxu0 1.0
        %224 = vmatprep.subr.mxu0 0.0
        %225 = vmatpush1.msra.mxu0 1.0
        %226 = vmatprep.subr.mxu0 0.0
        %227 = vmatpush1.msra.mxu0 1.0
        %228 = vmatprep.subr.mxu0 0.0
        %229 = vmatpush1.msra.mxu0 1.0
        %230 = vmatprep.subr.mxu0 0.0
        %231 = vmatpush1.msra.mxu0 1.0
        %232 = vmatprep.subr.mxu0 0.0
        %233 = vmatpush1.msra.mxu0 1.0
        %234 = vmatprep.subr.mxu0 0.0
        %235 = vmatpush1.msra.mxu0 1.0
        %236 = vmatprep.subr.mxu0 0.0
        %237 = vmatpush1.msra.mxu0 1.0
        %238 = vmatprep.subr.mxu0 0.0
        %239 = vmatpush1.msra.mxu0 1.0
        %240 = vmatprep.subr.mxu0 0.0
        %241 = vmatpush1.msra.mxu0 1.0
        %242 = vmatprep.subr.mxu0 0.0
        %243 = vmatpush1.msra.mxu0 1.0
        %244 = vmatprep.subr.mxu0 0.0
        %245 = vmatpush1.msra.mxu0 1.0
        %246 = vmatprep.subr.mxu0 0.0
        %247 = vmatpush1.msra.mxu0 1.0
        %248 = vmatprep.subr.mxu0 0.0
        %249 = vmatpush1.msra.mxu0 1.0
        %250 = vmatprep.subr.mxu0 0.0
        %251 = vmatpush1.msra.mxu0 1.0
        %252 = vmatprep.subr.mxu0 0.0
        %253 = vmatpush1.msra.mxu0 1.0
        %254 = vmatprep.subr.mxu0 0.0
        %255 = vmatpush1.msra.mxu0 1.0
        %256 = vmatprep.subr.mxu0 0.0
        %257 = vmatpush1.msra.mxu0 1.0
        %258 = vmatprep.subr.mxu0 0.0
        %259 = vmatpush1.msra.mxu0 1.0
        %260 = vmatprep.subr.mxu0 0.0
        %261 = vmatpush1.msra.mxu0 1.0
        %262 = vmatprep.subr.mxu0 0.0
        %263 = vmatpush1.msra.mxu0 1.0
        %264 = vmatprep.subr.mxu0 0.0
        %265 = vmatpush1.msra.mxu0 1.0
        %266 = vmatprep.subr.mxu0 0.0
        %267 = vmatpush1.msra.mxu0 1.0
        %268 = vmatprep.subr.mxu0 0.0
        %269 = vmatpush1.msra.mxu0 1.0
        %270 = vmatprep.subr.mxu0 0.0
        %271 = vmatpush1.msra.mxu0 1.0
        %272 = vmatprep.subr.mxu0 0.0
        %273 = vmatpush1.msra.mxu0 1.0
        %274 = vmatprep.subr.mxu0 0.0
        %275 = vmatpush1.msra.mxu0 1.0
        %276 = vmatprep.subr.mxu0 0.0
        %277 = vmatpush1.msra.mxu0 1.0
        %278 = vmatprep.subr.mxu0 0.0
        %279 = vmatpush1.msra.mxu0 1.0
        %280 = vmatprep.subr.mxu0 0.0
        %281 = vmatpush1.msra.mxu0 1.0
        %282 = vmatprep.mubr.f32.mxu0 %v216
        %283 = vmatmul.mubr.f32.gmra.mrb[0].mxu0 %v214
        %v284 = vpop.f32.mrb[0].mxu0
        %v285 = vadd.f32 0.0, %v284
        %v286 = vpop.f32.mrb[0].mxu0
        %287 = vdwg.mxu0
        %v288 = vmul.f32 %v285, 0.00390625
        %v289 = vld [vmem:[%s1] sm:$0x3]
        %vm290 = vcmask 31744
        %v292 = vsel %vm290, %v289, 0
        %vm294 = vcmask 1043456
        %v296 = vsel %vm294, %v288, 0
        %298 = vmatprep.subr.mxu0 0.0
        %299 = vmatpush1.msra.mxu0 %v296
        %300 = vmatprep.subr.mxu0 0.0
        %301 = vmatpush1.msra.mxu0 0.0
        %302 = vmatprep.subr.mxu0 0.0
        %303 = vmatpush1.msra.mxu0 0.0
        %304 = vmatprep.subr.mxu0 0.0
        %305 = vmatpush1.msra.mxu0 0.0
        %306 = vmatprep.subr.mxu0 0.0
        %307 = vmatpush1.msra.mxu0 0.0
        %308 = vmatprep.subr.mxu0 0.0
        %309 = vmatpush1.msra.mxu0 0.0
        %310 = vmatprep.subr.mxu0 0.0
        %311 = vmatpush1.msra.mxu0 0.0
        %312 = vmatprep.subr.mxu0 0.0
        %313 = vmatpush1.msra.mxu0 0.0
        %314 = vmatprep.subr.mxu0 0.0
        %315 = vmatpush1.msra.mxu0 0.0
        %316 = vmatprep.subr.mxu0 0.0
        %317 = vmatpush1.msra.mxu0 0.0
        %318 = vmatprep.subr.mxu0 0.0
        %319 = vmatpush1.msra.mxu0 0.0
        %320 = vmatprep.subr.mxu0 0.0
        %321 = vmatpush1.msra.mxu0 0.0
        %322 = vmatprep.subr.mxu0 0.0
        %323 = vmatpush1.msra.mxu0 0.0
        %324 = vmatprep.subr.mxu0 0.0
        %325 = vmatpush1.msra.mxu0 0.0
        %326 = vmatprep.subr.mxu0 0.0
        %327 = vmatpush1.msra.mxu0 0.0
        %328 = vmatprep.subr.mxu0 0.0
        %329 = vmatpush1.msra.mxu0 0.0
        %330 = vmatprep.subr.mxu0 0.0
        %331 = vmatpush1.msra.mxu0 0.0
        %332 = vmatprep.subr.mxu0 0.0
        %333 = vmatpush1.msra.mxu0 0.0
        %334 = vmatprep.subr.mxu0 0.0
        %335 = vmatpush1.msra.mxu0 0.0
        %336 = vmatprep.subr.mxu0 0.0
        %337 = vmatpush1.msra.mxu0 0.0
        %338 = vmatprep.subr.mxu0 0.0
        %339 = vmatpush1.msra.mxu0 0.0
        %340 = vmatprep.subr.mxu0 0.0
        %341 = vmatpush1.msra.mxu0 0.0
        %342 = vmatprep.subr.mxu0 0.0
        %343 = vmatpush1.msra.mxu0 0.0
        %344 = vmatprep.subr.mxu0 0.0
        %345 = vmatpush1.msra.mxu0 0.0
        %346 = vmatprep.subr.mxu0 0.0
        %347 = vmatpush1.msra.mxu0 0.0
        %348 = vmatprep.subr.mxu0 0.0
        %349 = vmatpush1.msra.mxu0 0.0
        %350 = vmatprep.subr.mxu0 0.0
        %351 = vmatpush1.msra.mxu0 0.0
        %352 = vmatprep.subr.mxu0 0.0
        %353 = vmatpush1.msra.mxu0 0.0
        %354 = vmatprep.subr.mxu0 0.0
        %355 = vmatpush1.msra.mxu0 0.0
        %356 = vmatprep.subr.mxu0 0.0
        %357 = vmatpush1.msra.mxu0 0.0
        %358 = vmatprep.subr.mxu0 0.0
        %359 = vmatpush1.msra.mxu0 0.0
        %360 = vmatprep.subr.mxu0 0.0
        %361 = vmatpush1.msra.mxu0 0.0
        %362 = vmatprep.mubr.f32.mxu0 0.0
        %363 = vmatmul.mubr.f32.gmra.mrb[0].mxu0 %v292
        %v364 = vpop.f32.mrb[0].mxu0
        %v365 = vadd.f32 0.0, %v364
        %v366 = vpop.f32.mrb[0].mxu0
        %367 = vdwg.mxu0
        %v368 = vld [vmem:[%s2] sm:$0xf]
        %vm369 = vcmask 15360
        %v371 = vsel %vm369, %v368, 0
        %vm373 = vcmask 1041408
        %v375 = vsel %vm373, %v365, 0
        %377 = vmatprep.subr.mxu0 0.0
        %378 = vmatpush1.msra.mxu0 %v375
        %379 = vmatprep.subr.mxu0 0.0
        %380 = vmatpush1.msra.mxu0 0.0
        %381 = vmatprep.subr.mxu0 0.0
        %382 = vmatpush1.msra.mxu0 0.0
        %383 = vmatprep.subr.mxu0 0.0
        %384 = vmatpush1.msra.mxu0 0.0
        %385 = vmatprep.subr.mxu0 0.0
        %386 = vmatpush1.msra.mxu0 0.0
        %387 = vmatprep.subr.mxu0 0.0
        %388 = vmatpush1.msra.mxu0 0.0
        %389 = vmatprep.subr.mxu0 0.0
        %390 = vmatpush1.msra.mxu0 0.0
        %391 = vmatprep.subr.mxu0 0.0
        %392 = vmatpush1.msra.mxu0 0.0
        %393 = vmatprep.subr.mxu0 0.0
        %394 = vmatpush1.msra.mxu0 0.0
        %395 = vmatprep.subr.mxu0 0.0
        %396 = vmatpush1.msra.mxu0 0.0
        %397 = vmatprep.subr.mxu0 0.0
        %398 = vmatpush1.msra.mxu0 0.0
        %399 = vmatprep.subr.mxu0 0.0
        %400 = vmatpush1.msra.mxu0 0.0
        %401 = vmatprep.subr.mxu0 0.0
        %402 = vmatpush1.msra.mxu0 0.0
        %403 = vmatprep.subr.mxu0 0.0
        %404 = vmatpush1.msra.mxu0 0.0
        %405 = vmatprep.subr.mxu0 0.0
        %406 = vmatpush1.msra.mxu0 0.0
        %407 = vmatprep.subr.mxu0 0.0
        %408 = vmatpush1.msra.mxu0 0.0
        %409 = vmatprep.subr.mxu0 0.0
        %410 = vmatpush1.msra.mxu0 0.0
        %411 = vmatprep.subr.mxu0 0.0
        %412 = vmatpush1.msra.mxu0 0.0
        %413 = vmatprep.subr.mxu0 0.0
        %414 = vmatpush1.msra.mxu0 0.0
        %415 = vmatprep.subr.mxu0 0.0
        %416 = vmatpush1.msra.mxu0 0.0
        %417 = vmatprep.subr.mxu0 0.0
        %418 = vmatpush1.msra.mxu0 0.0
        %419 = vmatprep.subr.mxu0 0.0
        %420 = vmatpush1.msra.mxu0 0.0
        %421 = vmatprep.subr.mxu0 0.0
        %422 = vmatpush1.msra.mxu0 0.0
        %423 = vmatprep.subr.mxu0 0.0
        %424 = vmatpush1.msra.mxu0 0.0
        %425 = vmatprep.subr.mxu0 0.0
        %426 = vmatpush1.msra.mxu0 0.0
        %427 = vmatprep.subr.mxu0 0.0
        %428 = vmatpush1.msra.mxu0 0.0
        %429 = vmatprep.subr.mxu0 0.0
        %430 = vmatpush1.msra.mxu0 0.0
        %431 = vmatprep.subr.mxu0 0.0
        %432 = vmatpush1.msra.mxu0 0.0
        %433 = vmatprep.subr.mxu0 0.0
        %434 = vmatpush1.msra.mxu0 0.0
        %435 = vmatprep.subr.mxu0 0.0
        %436 = vmatpush1.msra.mxu0 0.0
        %437 = vmatprep.subr.mxu0 0.0
        %438 = vmatpush1.msra.mxu0 0.0
        %439 = vmatprep.subr.mxu0 0.0
        %440 = vmatpush1.msra.mxu0 0.0
        %441 = vmatprep.mubr.f32.mxu0 0.0
        %442 = vmatmul.mubr.f32.gmra.mrb[0].mxu0 %v371
        %v443 = vpop.f32.mrb[0].mxu0
        %v444 = vadd.f32 0.0, %v443
        %v445 = vpop.f32.mrb[0].mxu0
        %446 = vdwg.mxu0
        %v447 = vxor.u32 %v444, 2147483648
        %v448 = vmul.f32 %v447, 1.442695
        %v449 = vpow.pop %v448
        %v450 = vadd.f32 %v449, 1.0
        %v451 = vrcp.pop %v450
        %v452 = vmul.f32 1.0, %v451
        %v453 = vld [vmem:[%s3] sm:$0x1]
        %v455 = vsel %vm290, %v453, 0
        %v457 = vsel %vm294, %v214, 0
        %v459 = vsel %vm294, %v216, 0
        %461 = vmatprep.subr.mxu0 %v459
        %462 = vmatpush1.msra.mxu0 %v457
        %463 = vmatprep.subr.mxu0 0.0
        %464 = vmatpush1.msra.mxu0 0.0
        %465 = vmatprep.subr.mxu0 0.0
        %466 = vmatpush1.msra.mxu0 0.0
        %467 = vmatprep.subr.mxu0 0.0
        %468 = vmatpush1.msra.mxu0 0.0
        %469 = vmatprep.subr.mxu0 0.0
        %470 = vmatpush1.msra.mxu0 0.0
        %471 = vmatprep.subr.mxu0 0.0
        %472 = vmatpush1.msra.mxu0 0.0
        %473 = vmatprep.subr.mxu0 0.0
        %474 = vmatpush1.msra.mxu0 0.0
        %475 = vmatprep.subr.mxu0 0.0
        %476 = vmatpush1.msra.mxu0 0.0
        %477 = vmatprep.subr.mxu0 0.0
        %478 = vmatpush1.msra.mxu0 0.0
        %479 = vmatprep.subr.mxu0 0.0
        %480 = vmatpush1.msra.mxu0 0.0
        %481 = vmatprep.subr.mxu0 0.0
        %482 = vmatpush1.msra.mxu0 0.0
        %483 = vmatprep.subr.mxu0 0.0
        %484 = vmatpush1.msra.mxu0 0.0
        %485 = vmatprep.subr.mxu0 0.0
        %486 = vmatpush1.msra.mxu0 0.0
        %487 = vmatprep.subr.mxu0 0.0
        %488 = vmatpush1.msra.mxu0 0.0
        %489 = vmatprep.subr.mxu0 0.0
        %490 = vmatpush1.msra.mxu0 0.0
        %491 = vmatprep.subr.mxu0 0.0
        %492 = vmatpush1.msra.mxu0 0.0
        %493 = vmatprep.subr.mxu0 0.0
        %494 = vmatpush1.msra.mxu0 0.0
        %495 = vmatprep.subr.mxu0 0.0
        %496 = vmatpush1.msra.mxu0 0.0
        %497 = vmatprep.subr.mxu0 0.0
        %498 = vmatpush1.msra.mxu0 0.0
        %499 = vmatprep.subr.mxu0 0.0
        %500 = vmatpush1.msra.mxu0 0.0
        %501 = vmatprep.subr.mxu0 0.0
        %502 = vmatpush1.msra.mxu0 0.0
        %503 = vmatprep.subr.mxu0 0.0
        %504 = vmatpush1.msra.mxu0 0.0
        %505 = vmatprep.subr.mxu0 0.0
        %506 = vmatpush1.msra.mxu0 0.0
        %507 = vmatprep.subr.mxu0 0.0
        %508 = vmatpush1.msra.mxu0 0.0
        %509 = vmatprep.subr.mxu0 0.0
        %510 = vmatpush1.msra.mxu0 0.0
        %511 = vmatprep.subr.mxu0 0.0
        %512 = vmatpush1.msra.mxu0 0.0
        %513 = vmatprep.subr.mxu0 0.0
        %514 = vmatpush1.msra.mxu0 0.0
        %515 = vmatprep.subr.mxu0 0.0
        %516 = vmatpush1.msra.mxu0 0.0
        %517 = vmatprep.subr.mxu0 0.0
        %518 = vmatpush1.msra.mxu0 0.0
        %519 = vmatprep.subr.mxu0 0.0
        %520 = vmatpush1.msra.mxu0 0.0
        %521 = vmatprep.subr.mxu0 0.0
        %522 = vmatpush1.msra.mxu0 0.0
        %523 = vmatprep.subr.mxu0 0.0
        %524 = vmatpush1.msra.mxu0 0.0
        %525 = vmatprep.mubr.f32.mxu0 0.0
        %526 = vmatmul.mubr.f32.gmra.mrb[0].mxu0 %v455
        %v527 = vpop.f32.mrb[0].mxu0
        %v528 = vadd.f32 0.0, %v527
        %v529 = vpop.f32.mrb[0].mxu0
        %v530 = vadd.f32 0.0, %v529
        %531 = vdwg.mxu0
        %v532 = vxor.u32 %v528, 2147483648
        %v533 = vxor.u32 %v530, 2147483648
        %v534 = vmul.f32 %v532, 1.442695
        %v535 = vpow.pop %v534
        %v536 = vmul.f32 %v533, 1.442695
        %v537 = vpow.pop %v536
        %v538 = vadd.f32 %v535, 1.0
        %v539 = vadd.f32 %v537, 1.0
        %v540 = vrcp.pop %v538
        %v541 = vmul.f32 1.0, %v540
        %v542 = vrcp.pop %v539
        %v543 = vmul.f32 1.0, %v542
        %545 = vset.pattern.permute.xlu0 0
        %546 = vperm.xlu0 %545, %v452
        %v547 = vpop.permute.xlu0 %546
        %v549 = vlaneseq
        %v550 = vshrl.u32 %v549, 7
        %v551 = vsub.s32 0, %v550
        %v552 = vrot.slane %v541, %v551
        %v553 = vlaneseq
        %v554 = vshrl.u32 %v553, 7
        %v555 = vsub.s32 0, %v554
        %v556 = vrot.slane %v543, %v555
        %v557 = vadd.f32 %v547, %v552
        %v558 = vadd.f32 %v547, %v556
        %v561 = vcombine.low %v557, %v558
        %v563 = vmul.f32 %v214, %v561
        %564 = vst [vmem:[%s213] sm:$0xff] %v563
        %s565 = sand.u32 %s118, 1
        %s566 = scalar_lea.sflag [#allocation4], %s565
        %s567 = sand.u32 %s118, 1
        %s568 = smul.addr %s567, 8
        %s569 = scalar_lea.vmem [#allocation5], %s568
        // Predicated region
        $region41: #{tpu_custom_call.1} parent=35 // pred_check
          %p570 = pneg %p128
        $region42: #{tpu_custom_call.1} parent=35 // pred_check_branch
          %572 = sbr.rel (%p570) target = $region44
        $region43: #{tpu_custom_call.1} parent=35 // pred_region
          %s574 = ssub.s32 128, 128
          %575 = vsyncadd %s566, %s574
          %s576 = smul.addr %s21, 2
          %s577 = smul.addr %s576, 64
          %s578 = scalar_lea.hbm %s4, %s577
          %s580 = sshll.u32 %s569, 4
          %s581 = int_to_ptr.vmem [resolvable:$true] %s580
          %583 = dma.vmem_to_hbm [thread:$0]  %s581, 128, %s578, %s566
        $region44: #{tpu_custom_call.1} parent=35 // pred_fallthru
          _
      $region36: #{tpu_custom_call.1} parent=5 // pred_fallthru
        _
      %p584 = scmp.le.s32.totalorder 2, %s16
      // Predicated region
      $region45: #{tpu_custom_call.1} parent=5 // pred_check
        %p585 = pneg %p584
      $region46: #{tpu_custom_call.1} parent=5 // pred_check_branch
        %587 = sbr.rel (%p585) target = $region48
      $region47: #{tpu_custom_call.1} parent=5 // pred_region
        %s588 = ssub.s32 %s16, 2
        // Predicated region
        $region49: #{tpu_custom_call.1} parent=47 // pred_check
          %p589 = pneg %p134
        $region50: #{tpu_custom_call.1} parent=47 // pred_check_branch
          %591 = sbr.rel (%p589) target = $region52
        $region51: #{tpu_custom_call.1} parent=47 // pred_region
          %s592 = sand.u32 %s119, 1
          %s593 = scalar_lea.sflag [#allocation4], %s592
          %s594 = sand.u32 %s119, 1
          %s595 = smul.addr %s594, 8
          %s596 = scalar_lea.vmem [#allocation5], %s595
          %597 = dma.done %s593, 128
        $region52: #{tpu_custom_call.1} parent=47 // pred_fallthru
          _
      $region48: #{tpu_custom_call.1} parent=5 // pred_fallthru
        _
    $region6: #{tpu_custom_call.1} parent=1 // loop_footer
      %s20 = sadd.s32 1, %s16
    $region7: #{tpu_custom_call.1} parent=1 // loop_footer_branch
      %15 = sbr.rel target = $region3
    $region8: #{tpu_custom_call.1} parent=1 // loop_exit
      _
    %598 = vsyncpa [#allocation3], 1
    %s599 = scalar_lea.sflag [#allocation3], 1
    %600 = vsyncpa %s599, 1
    %601 = vsyncpa [#allocation4], 1
    %s602 = scalar_lea.sflag [#allocation4], 1
    %603 = vsyncpa %s602, 1

</llo_original>
